<compile_context>
chip_gen: v7x
topology: tpu7x:2x2x1
jax: 0.10.0
libtpu: 0.0.40
codegen_flags: <defaults>
</compile_context>

<pallas_src>
import functools

import jax
import jax.numpy as jnp
from jax.experimental import pallas as pl
from jax.experimental.pallas import tpu as pltpu


def _round_up(x, m):
    return ((x + m - 1) // m) * m


# ----------------------------------------------------------------------------
# Kernels
# ----------------------------------------------------------------------------
def _policy_mean_kernel(s_ref, w1_ref, w2_ref, w3_ref, bp_ref, out_ref, *,
                        hpad, apad):
    """Deterministic path: mean only. Shapes are lane-dense (128 multiples)."""
    x = s_ref[...]                                   # [TM, Sp] bf16
    b1 = bp_ref[:, 0:hpad]                           # [1, Hp]  f32
    b2 = bp_ref[:, hpad:2 * hpad]                    # [1, Hp]  f32
    b3 = bp_ref[:, 2 * hpad:2 * hpad + apad]         # [1, Ap]  f32

    h1 = jnp.tanh(
        jnp.dot(x, w1_ref[...], preferred_element_type=jnp.float32) + b1)
    h2 = jnp.tanh(
        jnp.dot(h1.astype(jnp.bfloat16), w2_ref[...],
                preferred_element_type=jnp.float32) + b2)
    mean = jnp.dot(h2.astype(jnp.bfloat16), w3_ref[...],
                   preferred_element_type=jnp.float32) + b3

    out_ref[...] = mean                              # single unmasked store


def _policy_sample_kernel(s_ref, noise_ref, w1_ref, w2_ref, w3_ref, bp_ref,
                          out_ref, *, hpad, apad):
    """Stochastic path: fused [action | mean] output slab."""
    x = s_ref[...]                                   # [TM, Sp] bf16
    b1 = bp_ref[:, 0:hpad]
    b2 = bp_ref[:, hpad:2 * hpad]
    b3 = bp_ref[:, 2 * hpad:2 * hpad + apad]
    log_std = bp_ref[:, 2 * hpad + apad:2 * hpad + 2 * apad]   # [1, Ap]

    h1 = jnp.tanh(
        jnp.dot(x, w1_ref[...], preferred_element_type=jnp.float32) + b1)
    h2 = jnp.tanh(
        jnp.dot(h1.astype(jnp.bfloat16), w2_ref[...],
                preferred_element_type=jnp.float32) + b2)
    mean = jnp.dot(h2.astype(jnp.bfloat16), w3_ref[...],
                   preferred_element_type=jnp.float32) + b3

    std = jnp.exp(log_std)                           # [1, Ap], EUP
    action = mean + std * noise_ref[...]             # reparameterized sample

    # fused, 128-aligned, unmasked stores into one output slab
    out_ref[:, 0:apad] = action
    out_ref[:, apad:2 * apad] = mean


# ----------------------------------------------------------------------------
# Parameter packing (done once, outside the hot path)
# ----------------------------------------------------------------------------
def pack_policy_params(params):
    """Pad S/H/A to lane multiples (128), cast weights to bf16, pack biases."""
    S, H = params["w1"].shape
    A = params["w3"].shape[1]
    Sp, Hp, Ap = _round_up(S, 128), _round_up(H, 128), _round_up(A, 128)

    def pad2(w, r, c):
        return jnp.pad(w, ((0, r - w.shape[0]), (0, c - w.shape[1])))

    w1 = pad2(params["w1"], Sp, Hp).astype(jnp.bfloat16)
    w2 = pad2(params["w2"], Hp, Hp).astype(jnp.bfloat16)
    w3 = pad2(params["w3"], Hp, Ap).astype(jnp.bfloat16)

    b1 = pad2(params["b1"].reshape(1, -1).astype(jnp.float32), 1, Hp)
    b2 = pad2(params["b2"].reshape(1, -1).astype(jnp.float32), 1, Hp)
    b3 = pad2(params["b3"].reshape(1, -1).astype(jnp.float32), 1, Ap)
    ls = pad2(params["log_std"].reshape(1, -1).astype(jnp.float32), 1, Ap)
    bias_pack = jnp.concatenate([b1, b2, b3, ls], axis=1)  # [1, 2Hp+2Ap] f32

    return {
        "w1": w1, "w2": w2, "w3": w3,
        "bias_pack": bias_pack,
        # unpadded log_std kept for the wrapper (std is state-independent)
        "log_std": params["log_std"].reshape(1, -1).astype(jnp.float32),
    }


# ----------------------------------------------------------------------------
# Forward wrapper (equivalent of BaseRLAgent.forward hot path)
# ----------------------------------------------------------------------------
@functools.partial(jax.jit, static_argnames=("deterministic",))
def base_rl_agent_forward(state, packed, noise, deterministic=True):
    """Returns (action, (mean, std)), mirroring CentralizedOutput."""
    B, S = state.shape
    Sp, Hp = packed["w1"].shape
    Ap = packed["w3"].shape[1]
    A = packed["log_std"].shape[1]

    # Batch tiling: TM rows per grid step (multiple of 8 sublanes).
    TM = 512 if B >= 512 else _round_up(max(B, 1), 8)
    Bp = _round_up(B, TM)
    grid = (Bp // TM,)

    x = jnp.pad(state.astype(jnp.bfloat16), ((0, Bp - B), (0, Sp - S)))

    def w_spec(shape):
        return pl.BlockSpec(shape, lambda i: (0, 0))   # weights pinned in VMEM

    comp = pltpu.CompilerParams(
        dimension_semantics=("parallel",),             # megacore split on v7x
        vmem_limit_bytes=48 * 1024 * 1024,             # sized for v7x 64 MiB
    )

    weight_specs = [
        w_spec((Sp, Hp)),
        w_spec((Hp, Hp)),
        w_spec((Hp, Ap)),
        pl.BlockSpec((1, 2 * Hp + 2 * Ap), lambda i: (0, 0)),
    ]
    weight_args = (packed["w1"], packed["w2"], packed["w3"],
                   packed["bias_pack"])

    if deterministic:
        kern = functools.partial(_policy_mean_kernel, hpad=Hp, apad=Ap)
        out = pl.pallas_call(
            kern,
            out_shape=jax.ShapeDtypeStruct((Bp, Ap), jnp.float32),
            grid=grid,
            in_specs=[pl.BlockSpec((TM, Sp), lambda i: (i, 0))] + weight_specs,
            out_specs=pl.BlockSpec((TM, Ap), lambda i: (i, 0)),
            compiler_params=comp,
        )(x, *weight_args)
        mean = out[:B, :A]
        action = mean
    else:
        eps = jnp.pad(noise.astype(jnp.float32), ((0, Bp - B), (0, Ap - A)))
        kern = functools.partial(_policy_sample_kernel, hpad=Hp, apad=Ap)
        out = pl.pallas_call(
            kern,
            out_shape=jax.ShapeDtypeStruct((Bp, 2 * Ap), jnp.float32),
            grid=grid,
            in_specs=[pl.BlockSpec((TM, Sp), lambda i: (i, 0)),
                      pl.BlockSpec((TM, Ap), lambda i: (i, 0))] + weight_specs,
            out_specs=pl.BlockSpec((TM, 2 * Ap), lambda i: (i, 0)),
            compiler_params=comp,
        )(x, eps, *weight_args)
        action = out[:B, :A]
        mean = out[:B, Ap:Ap + A]

    # std is state-independent: computed & broadcast outside the kernel.
    std = jnp.broadcast_to(jnp.exp(packed["log_std"]), (B, A))
    return action, (mean, std)


# ----------------------------------------------------------------------------
# Synthetic params + references
# ----------------------------------------------------------------------------
def init_policy_params(state_dim, hidden_dim, action_dim, seed=0):
    key = jax.random.PRNGKey(seed)
    k1, k2, k3 = jax.random.split(key, 3)

    def lin(k, fan_in, fan_out):
        scale = 1.0 / jnp.sqrt(jnp.float32(fan_in))
        return jax.random.uniform(k, (fan_in, fan_out), jnp.float32,
                                  minval=-1.0, maxval=1.0) * scale

    return {
        "w1": lin(k1, state_dim, hidden_dim),
        "b1": jnp.zeros((1, hidden_dim), jnp.float32),
        "w2": lin(k2, hidden_dim, hidden_dim),
        "b2": jnp.zeros((1, hidden_dim), jnp.float32),
        "w3": lin(k3, hidden_dim, action_dim),
        "b3": jnp.zeros((1, action_dim), jnp.float32),
        "log_std": jnp.full((1, action_dim), -0.5, jnp.float32),
    }


def _reference_forward_f32(state, params, noise, deterministic=True):
    h1 = jnp.tanh(state @ params["w1"] + params["b1"])
    h2 = jnp.tanh(h1 @ params["w2"] + params["b2"])
    mean = h2 @ params["w3"] + params["b3"]
    std = jnp.broadcast_to(jnp.exp(params["log_std"]), mean.shape)
    eps = jnp.zeros_like(mean) if deterministic else noise
    return mean + std * eps, (mean, std)


def _reference_forward_bf16(state, params, noise, deterministic=True):
    """Mimics the kernel's bf16-operand / f32-accumulate matmuls."""
    bf = jnp.bfloat16
    h1 = jnp.tanh(jnp.dot(state.astype(bf), params["w1"].astype(bf),
                          preferred_element_type=jnp.float32) + params["b1"])
    h2 = jnp.tanh(jnp.dot(h1.astype(bf), params["w2"].astype(bf),
                          preferred_element_type=jnp.float32) + params["b2"])
    mean = jnp.dot(h2.astype(bf), params["w3"].astype(bf),
                   preferred_element_type=jnp.float32) + params["b3"]
    std = jnp.broadcast_to(jnp.exp(params["log_std"]), mean.shape)
    eps = jnp.zeros_like(mean) if deterministic else noise
    return mean + std * eps, (mean, std)


if __name__ == "__main__":
    B, S, H, A = 2, 16, 32, 8   # batch, state_dim, hidden, action_dim

    key = jax.random.PRNGKey(0)
    k_state, k_noise = jax.random.split(key)
    state = jax.random.normal(k_state, (B, S), jnp.float32)
    noise = jax.random.normal(k_noise, (B, A), jnp.float32)

    params = init_policy_params(S, H, A, seed=0)
    packed = pack_policy_params(params)

    # ---- deterministic (evaluation) path --------------------------------
    action, (mean, std) = base_rl_agent_forward(state, packed, noise,
                                                deterministic=True)
    jax.block_until_ready((action, mean, std))

    ref_a16, (ref_m16, ref_s16) = _reference_forward_bf16(
        state, params, noise, deterministic=True)
    ref_a32, (ref_m32, ref_s32) = _reference_forward_f32(
        state, params, noise, deterministic=True)

    assert jnp.allclose(mean, ref_m16, atol=1e-2, rtol=1e-2)
    assert jnp.allclose(mean, ref_m32, atol=5e-2, rtol=5e-2)
    assert jnp.allclose(std, ref_s32, atol=1e-5, rtol=1e-5)
    assert jnp.array_equal(action, mean)   # deterministic => action == mean

    # ---- stochastic (sampling) path --------------------------------------
    action_s, (mean_s, std_s) = base_rl_agent_forward(state, packed, noise,
                                                      deterministic=False)
    jax.block_until_ready((action_s, mean_s, std_s))

    ref_as16, (ref_ms16, _) = _reference_forward_bf16(
        state, params, noise, deterministic=False)
    ref_as32, _ = _reference_forward_f32(state, params, noise,
                                         deterministic=False)

    assert jnp.allclose(mean_s, ref_ms16, atol=1e-2, rtol=1e-2)
    assert jnp.allclose(action_s, ref_as16, atol=1e-2, rtol=1e-2)
    assert jnp.allclose(action_s, ref_as32, atol=5e-2, rtol=5e-2)
    assert jnp.allclose(std_s, ref_s32, atol=1e-5, rtol=1e-5)

    print("KERNEL_OK")
</pallas_src>

<mosaic_0001>
module attributes {stable_mosaic.version = 11 : i64} {
  func.func @_policy_mean_kernel(%arg0: i32, %arg1: memref<8x128xbf16, #tpu.memory_space<vmem>>, %arg2: memref<128x128xbf16, #tpu.memory_space<vmem>>, %arg3: memref<128x128xbf16, #tpu.memory_space<vmem>>, %arg4: memref<128x128xbf16, #tpu.memory_space<vmem>>, %arg5: memref<1x512xf32, #tpu.memory_space<vmem>>, %arg6: memref<8x128xf32, #tpu.memory_space<vmem>>) attributes {dimension_semantics = [#tpu.dimension_semantics<parallel>], iteration_bounds = array<i64: 1>, scalar_prefetch = 0 : i64, scratch_operands = 0 : i64, tpu.core_type = #tpu.core_type<tc>, window_params = [{transform_indices = @transform_0, window_bounds = array<i64: 8, 128>}, {pipeline_mode = #tpu.pipeline_mode<synchronous>, transform_indices = @transform_1, window_bounds = array<i64: 128, 128>}, {pipeline_mode = #tpu.pipeline_mode<synchronous>, transform_indices = @transform_2, window_bounds = array<i64: 128, 128>}, {pipeline_mode = #tpu.pipeline_mode<synchronous>, transform_indices = @transform_3, window_bounds = array<i64: 128, 128>}, {pipeline_mode = #tpu.pipeline_mode<synchronous>, transform_indices = @transform_4, window_bounds = array<i64: 1, 512>}, {transform_indices = @transform_5, window_bounds = array<i64: 8, 128>}]} {
    %c0 = arith.constant 0 : index
    %c0_0 = arith.constant 0 : index
    %0 = vector.load %arg1[%c0, %c0_0] : memref<8x128xbf16, #tpu.memory_space<vmem>>, vector<8x128xbf16>
    %c0_1 = arith.constant 0 : index
    %c0_2 = arith.constant 0 : index
    %1 = vector.load %arg5[%c0_1, %c0_2] : memref<1x512xf32, #tpu.memory_space<vmem>>, vector<1x128xf32>
    %c0_3 = arith.constant 0 : index
    %c128 = arith.constant 128 : index
    %2 = vector.load %arg5[%c0_3, %c128] : memref<1x512xf32, #tpu.memory_space<vmem>>, vector<1x128xf32>
    %c0_4 = arith.constant 0 : index
    %c256 = arith.constant 256 : index
    %3 = vector.load %arg5[%c0_4, %c256] : memref<1x512xf32, #tpu.memory_space<vmem>>, vector<1x128xf32>
    %c0_5 = arith.constant 0 : index
    %c0_6 = arith.constant 0 : index
    %4 = vector.load %arg2[%c0_5, %c0_6] : memref<128x128xbf16, #tpu.memory_space<vmem>>, vector<128x128xbf16>
    %cst = arith.constant dense<0.000000e+00> : vector<8x128xf32>
    %5 = tpu.matmul %0, %4, %cst {dimension_numbers = #tpu.dot_dimension_numbers<[1], [0], [0], [1], [0, 0, 1, 1], [], []>} : vector<8x128xbf16>, vector<128x128xbf16>, vector<8x128xf32> -> vector<8x128xf32>
    %6 = vector.broadcast %1 : vector<1x128xf32> to vector<8x128xf32>
    %7 = arith.addf %5, %6 : vector<8x128xf32>
    %8 = math.tanh %7 : vector<8x128xf32>
    %9 = arith.truncf %8 : vector<8x128xf32> to vector<8x128xbf16>
    %c0_7 = arith.constant 0 : index
    %c0_8 = arith.constant 0 : index
    %10 = vector.load %arg3[%c0_7, %c0_8] : memref<128x128xbf16, #tpu.memory_space<vmem>>, vector<128x128xbf16>
    %cst_9 = arith.constant dense<0.000000e+00> : vector<8x128xf32>
    %11 = tpu.matmul %9, %10, %cst_9 {dimension_numbers = #tpu.dot_dimension_numbers<[1], [0], [0], [1], [0, 0, 1, 1], [], []>} : vector<8x128xbf16>, vector<128x128xbf16>, vector<8x128xf32> -> vector<8x128xf32>
    %12 = vector.broadcast %2 : vector<1x128xf32> to vector<8x128xf32>
    %13 = arith.addf %11, %12 : vector<8x128xf32>
    %14 = math.tanh %13 : vector<8x128xf32>
    %15 = arith.truncf %14 : vector<8x128xf32> to vector<8x128xbf16>
    %c0_10 = arith.constant 0 : index
    %c0_11 = arith.constant 0 : index
    %16 = vector.load %arg4[%c0_10, %c0_11] : memref<128x128xbf16, #tpu.memory_space<vmem>>, vector<128x128xbf16>
    %cst_12 = arith.constant dense<0.000000e+00> : vector<8x128xf32>
    %17 = tpu.matmul %15, %16, %cst_12 {dimension_numbers = #tpu.dot_dimension_numbers<[1], [0], [0], [1], [0, 0, 1, 1], [], []>} : vector<8x128xbf16>, vector<128x128xbf16>, vector<8x128xf32> -> vector<8x128xf32>
    %18 = vector.broadcast %3 : vector<1x128xf32> to vector<8x128xf32>
    %19 = arith.addf %17, %18 : vector<8x128xf32>
    %c0_13 = arith.constant 0 : index
    %c0_14 = arith.constant 0 : index
    %20 = vector.load %arg6[%c0_13, %c0_14] : memref<8x128xf32, #tpu.memory_space<vmem>>, vector<8x128xf32>
    tpu.vector_store %arg6[%c0_13, %c0_14], %19 {strides = array<i32>} : memref<8x128xf32, #tpu.memory_space<vmem>>, vector<8x128xf32>,
    return
  }
  func.func @transform_0(%arg0: i32) -> (i32, i32) {
    %c0_i32 = arith.constant 0 : i32
    %c0_i32_0 = arith.constant 0 : i32
    return %arg0, %c0_i32 : i32, i32
  }
  func.func @transform_1(%arg0: i32) -> (i32, i32) {
    %c0_i32 = arith.constant 0 : i32
    %c0_i32_0 = arith.constant 0 : i32
    %c0_i32_1 = arith.constant 0 : i32
    return %c0_i32, %c0_i32_0 : i32, i32
  }
  func.func @transform_2(%arg0: i32) -> (i32, i32) {
    %c0_i32 = arith.constant 0 : i32
    %c0_i32_0 = arith.constant 0 : i32
    %c0_i32_1 = arith.constant 0 : i32
    return %c0_i32, %c0_i32_0 : i32, i32
  }
  func.func @transform_3(%arg0: i32) -> (i32, i32) {
    %c0_i32 = arith.constant 0 : i32
    %c0_i32_0 = arith.constant 0 : i32
    %c0_i32_1 = arith.constant 0 : i32
    return %c0_i32, %c0_i32_0 : i32, i32
  }
  func.func @transform_4(%arg0: i32) -> (i32, i32) {
    %c0_i32 = arith.constant 0 : i32
    %c0_i32_0 = arith.constant 0 : i32
    %c0_i32_1 = arith.constant 0 : i32
    return %c0_i32, %c0_i32_0 : i32, i32
  }
  func.func @transform_5(%arg0: i32) -> (i32, i32) {
    %c0_i32 = arith.constant 0 : i32
    %c0_i32_0 = arith.constant 0 : i32
    return %arg0, %c0_i32 : i32, i32
  }
}

</mosaic_0001>

<llo_original>
// kernel: base_rl_agent_forward.1
$region0: #{base_rl_agent_forward.1}
  #allocation0 [shape = 'u32[]', space=smem, size = 0x4, offset = 0x4, fixed_abs, tag = 'smem constant byte address 0x4 - core index']
  #allocation1 [shape = 'u32[144,128]{1,0:T(1,128)}', space=vmem, size = 0x12000, scoped, tag = 'internal scratch']
  %s0 = inlined_call_operand.vmem [shape: bf16[8,128], index: 0, kind: input, shape index: {}]
  %s1 = inlined_call_operand.hbm [shape: bf16[128,128], index: 1, kind: input, shape index: {}]
  %s2 = inlined_call_operand.hbm [shape: bf16[128,128], index: 2, kind: input, shape index: {}]
  %s3 = inlined_call_operand.hbm [shape: bf16[128,128], index: 3, kind: input, shape index: {}]
  %s4 = inlined_call_operand.vmem [shape: f32[1,512], index: 4, kind: input, shape index: {}]
  %s5 = inlined_call_operand.vmem [shape: f32[8,128], index: 5, kind: output, shape index: {}]
  %s6 = sld [smem:[#allocation0]]
  $region42: #{base_rl_agent_forward.1} parent=0
    _
  %s8 = ssub.s32 1, %s6
  %s9 = scalar_select 0, %s8, %s6
  $region1: #{base_rl_agent_forward.1} parent=0
    #allocation2 [shape = 'u8[32768]{0}', space=vmem, size = 0x8000, scoped, tag = 'input window, operand 1, single buffered']
    #allocation3 [shape = 's32[1]{0}', space=sflag, size = 0x4, scoped, tag = 'scoped memory for base_rl_agent_forward.1']
    #allocation4 [shape = 'u8[32768]{0}', space=vmem, size = 0x8000, scoped, tag = 'input window, operand 2, single buffered']
    #allocation5 [shape = 's32[1]{0}', space=sflag, size = 0x4, scoped, tag = 'scoped memory for base_rl_agent_forward.1']
    #allocation6 [shape = 'u8[32768]{0}', space=vmem, size = 0x8000, scoped, tag = 'input window, operand 3, single buffered']
    %10 = vsyncpa [#allocation3], 0
    %11 = vsyncpa [#allocation5], 0
    // Predicated region
    $region2: #{base_rl_agent_forward.1} parent=1 // pred_check
      _
    $region3: #{base_rl_agent_forward.1} parent=1 // pred_check_branch
      %13 = sbr.rel (0) target = $region5
    $region4: #{base_rl_agent_forward.1} parent=1 // pred_region
      _
    $region5: #{base_rl_agent_forward.1} parent=1 // pred_fallthru
      _
    // Predicated region
    $region6: #{base_rl_agent_forward.1} parent=1 // pred_check
      _
    $region7: #{base_rl_agent_forward.1} parent=1 // pred_check_branch
      %15 = sbr.rel (0) target = $region9
    $region8: #{base_rl_agent_forward.1} parent=1 // pred_region
      %s17 = ssub.s32 1024, 1024
      %18 = vsyncadd [#allocation3], %s17
      %s19 = sshll.u32 [#allocation2], 4
      %s20 = int_to_ptr.vmem [resolvable:$true] %s19
      %25 = dma.hbm_to_vmem [thread:$0]  %s1, 1024, %s20, [#allocation3], 64, 64, 4
    $region9: #{base_rl_agent_forward.1} parent=1 // pred_fallthru
      _
    // Predicated region
    $region10: #{base_rl_agent_forward.1} parent=1 // pred_check
      _
    $region11: #{base_rl_agent_forward.1} parent=1 // pred_check_branch
      %27 = sbr.rel (0) target = $region13
    $region12: #{base_rl_agent_forward.1} parent=1 // pred_region
      %s29 = ssub.s32 1024, 1024
      %30 = vsyncadd [#allocation5], %s29
      %s31 = sshll.u32 [#allocation4], 4
      %s32 = int_to_ptr.vmem [resolvable:$true] %s31
      %37 = dma.hbm_to_vmem [thread:$0]  %s2, 1024, %s32, [#allocation5], 64, 64, 4
    $region13: #{base_rl_agent_forward.1} parent=1 // pred_fallthru
      _
    // Predicated region
    $region14: #{base_rl_agent_forward.1} parent=1 // pred_check
      _
    $region15: #{base_rl_agent_forward.1} parent=1 // pred_check_branch
      %39 = sbr.rel (0) target = $region17
    $region16: #{base_rl_agent_forward.1} parent=1 // pred_region
      %s41 = ssub.s32 1024, 1024
      %42 = vsyncadd [#allocation5], %s41
      %s43 = sshll.u32 [#allocation6], 4
      %s44 = int_to_ptr.vmem [resolvable:$true] %s43
      %49 = dma.hbm_to_vmem [thread:$0]  %s3, 1024, %s44, [#allocation5], 64, 64, 4
    $region17: #{base_rl_agent_forward.1} parent=1 // pred_fallthru
      _
    // Predicated region
    $region18: #{base_rl_agent_forward.1} parent=1 // pred_check
      _
    $region19: #{base_rl_agent_forward.1} parent=1 // pred_check_branch
      %51 = sbr.rel (0) target = $region21
    $region20: #{base_rl_agent_forward.1} parent=1 // pred_region
      _
    $region21: #{base_rl_agent_forward.1} parent=1 // pred_fallthru
      _
    // Predicated region
    $region22: #{base_rl_agent_forward.1} parent=1 // pred_check
      _
    $region23: #{base_rl_agent_forward.1} parent=1 // pred_check_branch
      %53 = sbr.rel (0) target = $region25
    $region24: #{base_rl_agent_forward.1} parent=1 // pred_region
      %54 = dma.done [#allocation3], 1024
    $region25: #{base_rl_agent_forward.1} parent=1 // pred_fallthru
      _
    // Predicated region
    $region26: #{base_rl_agent_forward.1} parent=1 // pred_check
      _
    $region27: #{base_rl_agent_forward.1} parent=1 // pred_check_branch
      %56 = sbr.rel (0) target = $region29
    $region28: #{base_rl_agent_forward.1} parent=1 // pred_region
      %57 = dma.done [#allocation5], 1024
    $region29: #{base_rl_agent_forward.1} parent=1 // pred_fallthru
      _
    // Predicated region
    $region30: #{base_rl_agent_forward.1} parent=1 // pred_check
      _
    $region31: #{base_rl_agent_forward.1} parent=1 // pred_check_branch
      %59 = sbr.rel (0) target = $region33
    $region32: #{base_rl_agent_forward.1} parent=1 // pred_region
      %60 = dma.done [#allocation5], 1024
    $region33: #{base_rl_agent_forward.1} parent=1 // pred_fallthru
      _
    %v62 = vld [vmem:[%s0] sm:$0xf]
    %v63 = vld [vmem:[%s4] sm:$0x1]
    %v64 = vld [vmem:[%s4 + $0x1] sm:$0x1]
    %v65 = vld [vmem:[%s4 + $0x2] sm:$0x1]
    %v66 = vld [vmem:[#allocation2] sm:$0xf]
    %v67 = vld [vmem:[#allocation2 + $0x4] sm:$0xf]
    %v68 = vld [vmem:[#allocation2 + $0x8] sm:$0xf]
    %v69 = vld [vmem:[#allocation2 + $0xc] sm:$0xf]
    %v70 = vld [vmem:[#allocation2 + $0x10] sm:$0xf]
    %v71 = vld [vmem:[#allocation2 + $0x14] sm:$0xf]
    %v72 = vld [vmem:[#allocation2 + $0x18] sm:$0xf]
    %v73 = vld [vmem:[#allocation2 + $0x1c] sm:$0xf]
    %v74 = vld [vmem:[#allocation2 + $0x20] sm:$0xf]
    %v75 = vld [vmem:[#allocation2 + $0x24] sm:$0xf]
    %v76 = vld [vmem:[#allocation2 + $0x28] sm:$0xf]
    %v77 = vld [vmem:[#allocation2 + $0x2c] sm:$0xf]
    %v78 = vld [vmem:[#allocation2 + $0x30] sm:$0xf]
    %v79 = vld [vmem:[#allocation2 + $0x34] sm:$0xf]
    %v80 = vld [vmem:[#allocation2 + $0x38] sm:$0xf]
    %v81 = vld [vmem:[#allocation2 + $0x3c] sm:$0xf]
    %v83 = vlaneseq
    %v84 = vshrl.u32 %v83, 7
    %v85 = vsub.s32 0, %v84
    %v86 = vrot.slane %v63, %v85
    %v104 = vunpack.c.l.b16 %v66
    %v105 = vunpack.c.l.b16 %v67
    %v106 = vunpack.c.l.b16 %v68
    %v107 = vunpack.c.l.b16 %v69
    %v108 = vunpack.c.l.b16 %v70
    %v109 = vunpack.c.l.b16 %v71
    %v110 = vunpack.c.l.b16 %v72
    %v111 = vunpack.c.l.b16 %v73
    %v112 = vunpack.c.l.b16 %v74
    %v113 = vunpack.c.l.b16 %v75
    %v114 = vunpack.c.l.b16 %v76
    %v115 = vunpack.c.l.b16 %v77
    %v116 = vunpack.c.l.b16 %v78
    %v117 = vunpack.c.l.b16 %v79
    %v118 = vunpack.c.l.b16 %v80
    %v119 = vunpack.c.l.b16 %v81
    %v120 = vpack.c.b16 %v105, %v104
    %v121 = vpack.c.b16 %v107, %v106
    %v122 = vpack.c.b16 %v109, %v108
    %v123 = vpack.c.b16 %v111, %v110
    %v124 = vpack.c.b16 %v113, %v112
    %v125 = vpack.c.b16 %v115, %v114
    %v126 = vpack.c.b16 %v117, %v116
    %v127 = vpack.c.b16 %v119, %v118
    %136 = vmatprep.subr.bf16.mxu0 0
    %137 = vmatpush1.bf16.msra.mxu0 %v120
    %138 = vmatprep.subr.bf16.mxu0 0
    %139 = vmatpush1.bf16.msra.mxu0 %v121
    %140 = vmatprep.subr.bf16.mxu0 0
    %141 = vmatpush1.bf16.msra.mxu0 %v122
    %142 = vmatprep.subr.bf16.mxu0 0
    %143 = vmatpush1.bf16.msra.mxu0 %v123
    %144 = vmatprep.subr.bf16.mxu0 0
    %145 = vmatpush1.bf16.msra.mxu0 %v124
    %146 = vmatprep.subr.bf16.mxu0 0
    %147 = vmatpush1.bf16.msra.mxu0 %v125
    %148 = vmatprep.subr.bf16.mxu0 0
    %149 = vmatpush1.bf16.msra.mxu0 %v126
    %150 = vmatprep.subr.bf16.mxu0 0
    %151 = vmatpush1.bf16.msra.mxu0 %v127
    %152 = vmatprep.subr.bf16.mxu0 0
    %153 = vmatpush1.bf16.msra.mxu0 0
    %154 = vmatprep.subr.bf16.mxu0 0
    %155 = vmatpush1.bf16.msra.mxu0 0
    %156 = vmatprep.subr.bf16.mxu0 0
    %157 = vmatpush1.bf16.msra.mxu0 0
    %158 = vmatprep.subr.bf16.mxu0 0
    %159 = vmatpush1.bf16.msra.mxu0 0
    %160 = vmatprep.subr.bf16.mxu0 0
    %161 = vmatpush1.bf16.msra.mxu0 0
    %162 = vmatprep.subr.bf16.mxu0 0
    %163 = vmatpush1.bf16.msra.mxu0 0
    %164 = vmatprep.subr.bf16.mxu0 0
    %165 = vmatpush1.bf16.msra.mxu0 0
    %166 = vmatprep.subr.bf16.mxu0 0
    %167 = vmatpush1.bf16.msra.mxu0 0
    %168 = vmatprep.mubr.bf16.mxu0 0
    %169 = vmatmul.mubr.bf16.gmra.mrb[0].mxu0 %v62
    %v170 = vpop.f32.mrb[0].mxu0
    %v171 = vadd.f32 %v86, %v170
    %v172 = vpop.f32.mrb[0].mxu0
    %v173 = vpop.f32.mrb[0].mxu0
    %v174 = vpop.f32.mrb[0].mxu0
    %175 = vdwg.mxu0
    %v176 = vtanh.pop %v171
    %v177 = vpack.c.bf16 %v176, %v176
    %v178 = vld [vmem:[#allocation4] sm:$0xf]
    %v179 = vld [vmem:[#allocation4 + $0x4] sm:$0xf]
    %v180 = vld [vmem:[#allocation4 + $0x8] sm:$0xf]
    %v181 = vld [vmem:[#allocation4 + $0xc] sm:$0xf]
    %v182 = vld [vmem:[#allocation4 + $0x10] sm:$0xf]
    %v183 = vld [vmem:[#allocation4 + $0x14] sm:$0xf]
    %v184 = vld [vmem:[#allocation4 + $0x18] sm:$0xf]
    %v185 = vld [vmem:[#allocation4 + $0x1c] sm:$0xf]
    %v186 = vld [vmem:[#allocation4 + $0x20] sm:$0xf]
    %v187 = vld [vmem:[#allocation4 + $0x24] sm:$0xf]
    %v188 = vld [vmem:[#allocation4 + $0x28] sm:$0xf]
    %v189 = vld [vmem:[#allocation4 + $0x2c] sm:$0xf]
    %v190 = vld [vmem:[#allocation4 + $0x30] sm:$0xf]
    %v191 = vld [vmem:[#allocation4 + $0x34] sm:$0xf]
    %v192 = vld [vmem:[#allocation4 + $0x38] sm:$0xf]
    %v193 = vld [vmem:[#allocation4 + $0x3c] sm:$0xf]
    %v195 = vlaneseq
    %v196 = vshrl.u32 %v195, 7
    %v197 = vsub.s32 0, %v196
    %v198 = vrot.slane %v64, %v197
    %v216 = vunpack.c.l.b16 %v178
    %v217 = vunpack.c.l.b16 %v179
    %v218 = vunpack.c.l.b16 %v180
    %v219 = vunpack.c.l.b16 %v181
    %v220 = vunpack.c.l.b16 %v182
    %v221 = vunpack.c.l.b16 %v183
    %v222 = vunpack.c.l.b16 %v184
    %v223 = vunpack.c.l.b16 %v185
    %v224 = vunpack.c.l.b16 %v186
    %v225 = vunpack.c.l.b16 %v187
    %v226 = vunpack.c.l.b16 %v188
    %v227 = vunpack.c.l.b16 %v189
    %v228 = vunpack.c.l.b16 %v190
    %v229 = vunpack.c.l.b16 %v191
    %v230 = vunpack.c.l.b16 %v192
    %v231 = vunpack.c.l.b16 %v193
    %v232 = vpack.c.b16 %v217, %v216
    %v233 = vpack.c.b16 %v219, %v218
    %v234 = vpack.c.b16 %v221, %v220
    %v235 = vpack.c.b16 %v223, %v222
    %v236 = vpack.c.b16 %v225, %v224
    %v237 = vpack.c.b16 %v227, %v226
    %v238 = vpack.c.b16 %v229, %v228
    %v239 = vpack.c.b16 %v231, %v230
    %248 = vmatprep.subr.bf16.mxu0 0
    %249 = vmatpush1.bf16.msra.mxu0 %v232
    %250 = vmatprep.subr.bf16.mxu0 0
    %251 = vmatpush1.bf16.msra.mxu0 %v233
    %252 = vmatprep.subr.bf16.mxu0 0
    %253 = vmatpush1.bf16.msra.mxu0 %v234
    %254 = vmatprep.subr.bf16.mxu0 0
    %255 = vmatpush1.bf16.msra.mxu0 %v235
    %256 = vmatprep.subr.bf16.mxu0 0
    %257 = vmatpush1.bf16.msra.mxu0 %v236
    %258 = vmatprep.subr.bf16.mxu0 0
    %259 = vmatpush1.bf16.msra.mxu0 %v237
    %260 = vmatprep.subr.bf16.mxu0 0
    %261 = vmatpush1.bf16.msra.mxu0 %v238
    %262 = vmatprep.subr.bf16.mxu0 0
    %263 = vmatpush1.bf16.msra.mxu0 %v239
    %264 = vmatprep.subr.bf16.mxu0 0
    %265 = vmatpush1.bf16.msra.mxu0 0
    %266 = vmatprep.subr.bf16.mxu0 0
    %267 = vmatpush1.bf16.msra.mxu0 0
    %268 = vmatprep.subr.bf16.mxu0 0
    %269 = vmatpush1.bf16.msra.mxu0 0
    %270 = vmatprep.subr.bf16.mxu0 0
    %271 = vmatpush1.bf16.msra.mxu0 0
    %272 = vmatprep.subr.bf16.mxu0 0
    %273 = vmatpush1.bf16.msra.mxu0 0
    %274 = vmatprep.subr.bf16.mxu0 0
    %275 = vmatpush1.bf16.msra.mxu0 0
    %276 = vmatprep.subr.bf16.mxu0 0
    %277 = vmatpush1.bf16.msra.mxu0 0
    %278 = vmatprep.subr.bf16.mxu0 0
    %279 = vmatpush1.bf16.msra.mxu0 0
    %280 = vmatprep.mubr.bf16.mxu0 0
    %281 = vmatmul.mubr.bf16.gmra.mrb[0].mxu0 %v177
    %v282 = vpop.f32.mrb[0].mxu0
    %v283 = vadd.f32 %v198, %v282
    %v284 = vpop.f32.mrb[0].mxu0
    %v285 = vpop.f32.mrb[0].mxu0
    %v286 = vpop.f32.mrb[0].mxu0
    %287 = vdwg.mxu0
    %v288 = vtanh.pop %v283
    %v289 = vpack.c.bf16 %v288, %v288
    %v290 = vld [vmem:[#allocation6] sm:$0xf]
    %v291 = vld [vmem:[#allocation6 + $0x4] sm:$0xf]
    %v292 = vld [vmem:[#allocation6 + $0x8] sm:$0xf]
    %v293 = vld [vmem:[#allocation6 + $0xc] sm:$0xf]
    %v294 = vld [vmem:[#allocation6 + $0x10] sm:$0xf]
    %v295 = vld [vmem:[#allocation6 + $0x14] sm:$0xf]
    %v296 = vld [vmem:[#allocation6 + $0x18] sm:$0xf]
    %v297 = vld [vmem:[#allocation6 + $0x1c] sm:$0xf]
    %v298 = vld [vmem:[#allocation6 + $0x20] sm:$0xf]
    %v299 = vld [vmem:[#allocation6 + $0x24] sm:$0xf]
    %v300 = vld [vmem:[#allocation6 + $0x28] sm:$0xf]
    %v301 = vld [vmem:[#allocation6 + $0x2c] sm:$0xf]
    %v302 = vld [vmem:[#allocation6 + $0x30] sm:$0xf]
    %v303 = vld [vmem:[#allocation6 + $0x34] sm:$0xf]
    %v304 = vld [vmem:[#allocation6 + $0x38] sm:$0xf]
    %v305 = vld [vmem:[#allocation6 + $0x3c] sm:$0xf]
    %v307 = vlaneseq
    %v308 = vshrl.u32 %v307, 7
    %v309 = vsub.s32 0, %v308
    %v310 = vrot.slane %v65, %v309
    %v328 = vunpack.c.l.b16 %v290
    %v329 = vunpack.c.l.b16 %v291
    %v330 = vunpack.c.l.b16 %v292
    %v331 = vunpack.c.l.b16 %v293
    %v332 = vunpack.c.l.b16 %v294
    %v333 = vunpack.c.l.b16 %v295
    %v334 = vunpack.c.l.b16 %v296
    %v335 = vunpack.c.l.b16 %v297
    %v336 = vunpack.c.l.b16 %v298
    %v337 = vunpack.c.l.b16 %v299
    %v338 = vunpack.c.l.b16 %v300
    %v339 = vunpack.c.l.b16 %v301
    %v340 = vunpack.c.l.b16 %v302
    %v341 = vunpack.c.l.b16 %v303
    %v342 = vunpack.c.l.b16 %v304
    %v343 = vunpack.c.l.b16 %v305
    %v344 = vpack.c.b16 %v329, %v328
    %v345 = vpack.c.b16 %v331, %v330
    %v346 = vpack.c.b16 %v333, %v332
    %v347 = vpack.c.b16 %v335, %v334
    %v348 = vpack.c.b16 %v337, %v336
    %v349 = vpack.c.b16 %v339, %v338
    %v350 = vpack.c.b16 %v341, %v340
    %v351 = vpack.c.b16 %v343, %v342
    %360 = vmatprep.subr.bf16.mxu0 0
    %361 = vmatpush1.bf16.msra.mxu0 %v344
    %362 = vmatprep.subr.bf16.mxu0 0
    %363 = vmatpush1.bf16.msra.mxu0 %v345
    %364 = vmatprep.subr.bf16.mxu0 0
    %365 = vmatpush1.bf16.msra.mxu0 %v346
    %366 = vmatprep.subr.bf16.mxu0 0
    %367 = vmatpush1.bf16.msra.mxu0 %v347
    %368 = vmatprep.subr.bf16.mxu0 0
    %369 = vmatpush1.bf16.msra.mxu0 %v348
    %370 = vmatprep.subr.bf16.mxu0 0
    %371 = vmatpush1.bf16.msra.mxu0 %v349
    %372 = vmatprep.subr.bf16.mxu0 0
    %373 = vmatpush1.bf16.msra.mxu0 %v350
    %374 = vmatprep.subr.bf16.mxu0 0
    %375 = vmatpush1.bf16.msra.mxu0 %v351
    %376 = vmatprep.subr.bf16.mxu0 0
    %377 = vmatpush1.bf16.msra.mxu0 0
    %378 = vmatprep.subr.bf16.mxu0 0
    %379 = vmatpush1.bf16.msra.mxu0 0
    %380 = vmatprep.subr.bf16.mxu0 0
    %381 = vmatpush1.bf16.msra.mxu0 0
    %382 = vmatprep.subr.bf16.mxu0 0
    %383 = vmatpush1.bf16.msra.mxu0 0
    %384 = vmatprep.subr.bf16.mxu0 0
    %385 = vmatpush1.bf16.msra.mxu0 0
    %386 = vmatprep.subr.bf16.mxu0 0
    %387 = vmatpush1.bf16.msra.mxu0 0
    %388 = vmatprep.subr.bf16.mxu0 0
    %389 = vmatpush1.bf16.msra.mxu0 0
    %390 = vmatprep.subr.bf16.mxu0 0
    %391 = vmatpush1.bf16.msra.mxu0 0
    %392 = vmatprep.mubr.bf16.mxu0 0
    %393 = vmatmul.mubr.bf16.gmra.mrb[0].mxu0 %v289
    %v394 = vpop.f32.mrb[0].mxu0
    %v395 = vadd.f32 %v310, %v394
    %v396 = vpop.f32.mrb[0].mxu0
    %v397 = vpop.f32.mrb[0].mxu0
    %v398 = vpop.f32.mrb[0].mxu0
    %399 = vdwg.mxu0
    %400 = vst [vmem:[%s5] sm:$0xff] %v395
    // Predicated region
    $region34: #{base_rl_agent_forward.1} parent=1 // pred_check
      _
    $region35: #{base_rl_agent_forward.1} parent=1 // pred_check_branch
      %402 = sbr.rel (0) target = $region37
    $region36: #{base_rl_agent_forward.1} parent=1 // pred_region
      _
    $region37: #{base_rl_agent_forward.1} parent=1 // pred_fallthru
      _
    // Predicated region
    $region38: #{base_rl_agent_forward.1} parent=1 // pred_check
      _
    $region39: #{base_rl_agent_forward.1} parent=1 // pred_check_branch
      %404 = sbr.rel (0) target = $region41
    $region40: #{base_rl_agent_forward.1} parent=1 // pred_region
      _
    $region41: #{base_rl_agent_forward.1} parent=1 // pred_fallthru
      _
    %405 = vsyncpa [#allocation3], 1
    %406 = vsyncpa [#allocation5], 1

</llo_original>
